<compile_context>
chip_gen: v7x
topology: tpu7x:2x2x1
jax: 0.10.0
libtpu: 0.0.40
codegen_flags: <defaults>
</compile_context>

<pallas_src>
import jax
import jax.numpy as jnp
from jax.experimental import pallas as pl
from jax.experimental.pallas import tpu as pltpu

_HALF_LOG_2PI = 0.9189385332046727  # 0.5 * log(2*pi)


def _lgamma(z):
    """log Gamma(z) for z > 0 (f32), argument-shift + Stirling series.

    lgamma(z) = lgamma(z + 6) - log(z (z+1) ... (z+5))
    lgamma(w) ~ (w - 1/2) log w - w + 0.5 log(2 pi)
                + 1/(12 w) - 1/(360 w^3) + 1/(1260 w^5)
    Cost per call: 1 approximate reciprocal (EUP) + 2 logs (EUP) + a handful
    of VALU mul/add, versus 8 full divides for a term-by-term Lanczos sum.
    Valid (and accurate to ~1e-6 abs) for all z in (0, ~2e6], including the
    disp -> 0 limit.
    """
    p = z
    for k in range(1, 6):
        p = p * (z + float(k))          # z (z+1) ... (z+5), pure VALU
    w = z + 6.0
    r = pl.reciprocal(w, approx=True)   # only feeds the small correction term
    r2 = r * r
    series = r * (1.0 / 12.0 + r2 * (-1.0 / 360.0 + r2 * (1.0 / 1260.0)))
    return (w - 0.5) * jnp.log(w) - w + _HALF_LOG_2PI + series - jnp.log(p)


def _make_zinb_kernel(ridge_lambda: float, tile_g: int):
    n_lane_blocks = tile_g // 128

    def zinb_kernel(sf_ref, x_ref, mean_ref, disp_ref, pi_ref, out_ref, acc_ref):
        j = pl.program_id(1)

        @pl.when(j == 0)
        def _():
            acc_ref[...] = jnp.zeros_like(acc_ref)

        eps = 1e-10
        x = x_ref[...]
        mean = mean_ref[...] * sf_ref[...]            # (B, Gt) * (B, 1)
        disp = disp_ref[...]
        pi = pi_ref[...]

        # Shared logs (each reused below; removes all explicit divisions).
        ld = jnp.log(disp + eps)                      # log(disp + eps)
        lm = jnp.log(mean + eps)                      # log(mean + eps)
        ldm = jnp.log(disp + mean + eps)              # log(disp + mean + eps)

        t1 = _lgamma(disp + eps) + _lgamma(x + 1.0) - _lgamma(x + disp + eps)
        # log(1 + mean/(disp+eps)) == log(disp+mean+eps) - log(disp+eps)
        t2 = (disp + x) * (ldm - ld) + x * (ld - lm)
        nb_case = t1 + t2 - jnp.log(1.0 - pi + eps)

        # pow(disp/(disp+mean+eps), disp) == exp(disp*(log(disp+eps)-ldm))
        zero_nb = jnp.exp(disp * (ld - ldm))
        zero_case = -jnp.log(pi + (1.0 - pi) * zero_nb + eps)

        result = jnp.where(x <= 1e-8, zero_case, nb_case)
        if ridge_lambda > 0:
            result = result + ridge_lambda * jnp.square(pi)

        # Pure elementwise accumulation per step (no per-step XLU reduce,
        # no scalar RMW dependency).
        acc_ref[...] += result

        @pl.when(j == pl.num_programs(1) - 1)
        def _():
            # Fold the gene tile down to a lane-dense (B, 128) partial with
            # static, 128-aligned slices; the tiny final reduction happens in
            # the JAX wrapper.
            part = acc_ref[:, 0:128]
            for c in range(1, n_lane_blocks):
                part = part + acc_ref[:, c * 128:(c + 1) * 128]
            out_ref[...] = part[None]

    return zinb_kernel


def zinb_loss(x, mean, disp, pi, scale_factor, ridge_lambda=0.0,
              tile_g=1024, num_partitions=2):
    """Pallas ZINB loss. x/mean/disp/pi: (B, G); scale_factor: (B,)."""
    B, G = x.shape
    assert G % 128 == 0, "gene dim must be a multiple of 128"
    x = x.astype(jnp.float32)
    mean = mean.astype(jnp.float32)
    disp = disp.astype(jnp.float32)
    pi = pi.astype(jnp.float32)
    sf = jnp.asarray(scale_factor, jnp.float32).reshape(B, 1)

    # Largest multiple-of-128 tile <= tile_g that divides G.
    tile_g = max(128, min(int(tile_g) // 128 * 128, G))
    while G % tile_g != 0:
        tile_g -= 128
    steps = G // tile_g

    # Partition the gene range for the 'parallel' leading grid axis
    # (both TensorCores on v7x; a no-op split on 1-TC chips).
    P = num_partitions if (num_partitions > 0 and steps % num_partitions == 0) else 1
    steps_per_part = steps // P

    kernel = _make_zinb_kernel(float(ridge_lambda), tile_g)

    row_spec = pl.BlockSpec(
        (B, tile_g), lambda p, j: (0, p * steps_per_part + j))

    # VMEM budget: 5 inputs x 2 buffers + accumulator + outputs, with headroom.
    needed = 5 * 2 * B * tile_g * 4 + B * tile_g * 4 + P * B * 128 * 4 * 2
    vmem_limit = int(min(max(2 * needed, 16 * 2**20), 64 * 2**20))

    cost = pl.CostEstimate(
        flops=int(65 * B * G),
        transcendentals=int(15 * B * G),
        bytes_accessed=int(4 * 4 * B * G + 4 * B + 4 * P * B * 128),
    )

    partials = pl.pallas_call(
        kernel,
        out_shape=jax.ShapeDtypeStruct((P, B, 128), jnp.float32),
        grid_spec=pltpu.PrefetchScalarGridSpec(
            num_scalar_prefetch=0,
            grid=(P, steps_per_part),
            in_specs=[
                pl.BlockSpec((B, 1), lambda p, j: (0, 0)),  # scale factor (resident)
                row_spec,   # x
                row_spec,   # mean
                row_spec,   # disp
                row_spec,   # pi
            ],
            out_specs=pl.BlockSpec((1, B, 128), lambda p, j: (p, 0, 0)),
            scratch_shapes=[pltpu.VMEM((B, tile_g), jnp.float32)],
        ),
        compiler_params=pltpu.CompilerParams(
            dimension_semantics=("parallel", "arbitrary"),
            vmem_limit_bytes=vmem_limit,
        ),
        cost_estimate=cost,
    )(sf, x, mean, disp, pi)

    return jnp.sum(partials) / float(B * G)


def zinb_loss_ref(x, mean, disp, pi, scale_factor, ridge_lambda=0.0):
    """Pure-JAX reference mirroring the PyTorch forward."""
    eps = 1e-10
    sf = scale_factor[:, None]
    mean = mean * sf
    lg = jax.scipy.special.gammaln
    t1 = lg(disp + eps) + lg(x + 1.0) - lg(x + disp + eps)
    t2 = (disp + x) * jnp.log(1.0 + mean / (disp + eps)) + x * (
        jnp.log(disp + eps) - jnp.log(mean + eps)
    )
    nb_case = t1 + t2 - jnp.log(1.0 - pi + eps)
    zero_nb = jnp.power(disp / (disp + mean + eps), disp)
    zero_case = -jnp.log(pi + (1.0 - pi) * zero_nb + eps)
    result = jnp.where(x <= 1e-8, zero_case, nb_case)
    if ridge_lambda > 0:
        result = result + ridge_lambda * jnp.square(pi)
    return jnp.mean(result)


if __name__ == "__main__":
    B, G = 8, 2048
    key = jax.random.PRNGKey(0)
    k1, k2, k3, k4, k5 = jax.random.split(key, 5)

    # Synthetic count data and ZINB parameters (all f32, positive where needed).
    x = jnp.floor(
        jax.random.exponential(k1, (B, G), dtype=jnp.float32) * 3.0
    )  # nonnegative counts, many zeros
    mean = jax.nn.softplus(jax.random.normal(k2, (B, G), dtype=jnp.float32)) + 0.1
    disp = jax.nn.softplus(jax.random.normal(k3, (B, G), dtype=jnp.float32)) + 0.1
    pi = jax.nn.sigmoid(jax.random.normal(k4, (B, G), dtype=jnp.float32))
    scale_factor = jnp.exp(0.2 * jax.random.normal(k5, (B,), dtype=jnp.float32))

    # ridge_lambda = 0 path
    out = jax.block_until_ready(
        zinb_loss(x, mean, disp, pi, scale_factor, ridge_lambda=0.0, tile_g=512)
    )
    ref = jax.block_until_ready(
        zinb_loss_ref(x, mean, disp, pi, scale_factor, ridge_lambda=0.0)
    )
    assert jnp.allclose(out, ref, rtol=1e-3, atol=1e-3), (out, ref)

    # ridge_lambda > 0 path
    out_r = jax.block_until_ready(
        zinb_loss(x, mean, disp, pi, scale_factor, ridge_lambda=0.1, tile_g=512)
    )
    ref_r = jax.block_until_ready(
        zinb_loss_ref(x, mean, disp, pi, scale_factor, ridge_lambda=0.1)
    )
    assert jnp.allclose(out_r, ref_r, rtol=1e-3, atol=1e-3), (out_r, ref_r)

    print("KERNEL_OK")
</pallas_src>

<mosaic_0001>
module attributes {stable_mosaic.version = 11 : i64} {
  func.func @zinb_kernel(%arg0: i32, %arg1: i32, %arg2: memref<8x1xf32, #tpu.memory_space<vmem>>, %arg3: memref<8x512xf32, #tpu.memory_space<vmem>>, %arg4: memref<8x512xf32, #tpu.memory_space<vmem>>, %arg5: memref<8x512xf32, #tpu.memory_space<vmem>>, %arg6: memref<8x512xf32, #tpu.memory_space<vmem>>, %arg7: memref<1x8x128xf32, #tpu.memory_space<vmem>>, %arg8: memref<8x512xf32, #tpu.memory_space<vmem>>) attributes {dimension_semantics = [#tpu.dimension_semantics<parallel>, #tpu.dimension_semantics<arbitrary>], iteration_bounds = array<i64: 2, 2>, scalar_prefetch = 0 : i64, scratch_operands = 1 : i64, tpu.core_type = #tpu.core_type<tc>, window_params = [{pipeline_mode = #tpu.pipeline_mode<synchronous>, transform_indices = @transform_0, window_bounds = array<i64: 8, 1>}, {transform_indices = @transform_1, window_bounds = array<i64: 8, 512>}, {transform_indices = @transform_2, window_bounds = array<i64: 8, 512>}, {transform_indices = @transform_3, window_bounds = array<i64: 8, 512>}, {transform_indices = @transform_4, window_bounds = array<i64: 8, 512>}, {transform_indices = @transform_5, window_bounds = array<i64: 1, 8, 128>}]} {
    %c0_i32 = arith.constant 0 : i32
    %0 = arith.cmpi eq, %arg1, %c0_i32 : i32
    %1 = arith.extui %0 : i1 to i32
    %c0_i32_0 = arith.constant 0 : i32
    %2 = arith.cmpi ne, %1, %c0_i32_0 : i32
    scf.if %2 {
      %cst_59 = arith.constant 0.000000e+00 : f32
      %174 = vector.broadcast %cst_59 : f32 to vector<8x512xf32>
      %c0_60 = arith.constant 0 : index
      %c0_61 = arith.constant 0 : index
      %175 = vector.load %arg8[%c0_60, %c0_61] : memref<8x512xf32, #tpu.memory_space<vmem>>, vector<8x512xf32>
      tpu.vector_store %arg8[%c0_60, %c0_61], %174 {strides = array<i32>} : memref<8x512xf32, #tpu.memory_space<vmem>>, vector<8x512xf32>,
    } else {
    }
    %c0 = arith.constant 0 : index
    %c0_1 = arith.constant 0 : index
    %3 = vector.load %arg3[%c0, %c0_1] : memref<8x512xf32, #tpu.memory_space<vmem>>, vector<8x512xf32>
    %c0_2 = arith.constant 0 : index
    %c0_3 = arith.constant 0 : index
    %4 = vector.load %arg4[%c0_2, %c0_3] : memref<8x512xf32, #tpu.memory_space<vmem>>, vector<8x512xf32>
    %c0_4 = arith.constant 0 : index
    %c0_5 = arith.constant 0 : index
    %5 = vector.load %arg2[%c0_4, %c0_5] : memref<8x1xf32, #tpu.memory_space<vmem>>, vector<8x1xf32>
    %6 = vector.broadcast %5 : vector<8x1xf32> to vector<8x512xf32>
    %7 = arith.mulf %4, %6 : vector<8x512xf32>
    %c0_6 = arith.constant 0 : index
    %c0_7 = arith.constant 0 : index
    %8 = vector.load %arg5[%c0_6, %c0_7] : memref<8x512xf32, #tpu.memory_space<vmem>>, vector<8x512xf32>
    %c0_8 = arith.constant 0 : index
    %c0_9 = arith.constant 0 : index
    %9 = vector.load %arg6[%c0_8, %c0_9] : memref<8x512xf32, #tpu.memory_space<vmem>>, vector<8x512xf32>
    %cst = arith.constant 1.000000e-10 : f32
    %10 = vector.broadcast %cst : f32 to vector<8x512xf32>
    %11 = arith.addf %8, %10 : vector<8x512xf32>
    %12 = math.log %11 : vector<8x512xf32>
    %cst_10 = arith.constant 1.000000e-10 : f32
    %13 = vector.broadcast %cst_10 : f32 to vector<8x512xf32>
    %14 = arith.addf %7, %13 : vector<8x512xf32>
    %15 = math.log %14 : vector<8x512xf32>
    %16 = arith.addf %8, %7 : vector<8x512xf32>
    %cst_11 = arith.constant 1.000000e-10 : f32
    %17 = vector.broadcast %cst_11 : f32 to vector<8x512xf32>
    %18 = arith.addf %16, %17 : vector<8x512xf32>
    %19 = math.log %18 : vector<8x512xf32>
    %cst_12 = arith.constant 1.000000e-10 : f32
    %20 = vector.broadcast %cst_12 : f32 to vector<8x512xf32>
    %21 = arith.addf %8, %20 : vector<8x512xf32>
    %cst_13 = arith.constant 1.000000e+00 : f32
    %22 = vector.broadcast %cst_13 : f32 to vector<8x512xf32>
    %23 = arith.addf %21, %22 : vector<8x512xf32>
    %24 = arith.mulf %21, %23 : vector<8x512xf32>
    %cst_14 = arith.constant 2.000000e+00 : f32
    %25 = vector.broadcast %cst_14 : f32 to vector<8x512xf32>
    %26 = arith.addf %21, %25 : vector<8x512xf32>
    %27 = arith.mulf %24, %26 : vector<8x512xf32>
    %cst_15 = arith.constant 3.000000e+00 : f32
    %28 = vector.broadcast %cst_15 : f32 to vector<8x512xf32>
    %29 = arith.addf %21, %28 : vector<8x512xf32>
    %30 = arith.mulf %27, %29 : vector<8x512xf32>
    %cst_16 = arith.constant 4.000000e+00 : f32
    %31 = vector.broadcast %cst_16 : f32 to vector<8x512xf32>
    %32 = arith.addf %21, %31 : vector<8x512xf32>
    %33 = arith.mulf %30, %32 : vector<8x512xf32>
    %cst_17 = arith.constant 5.000000e+00 : f32
    %34 = vector.broadcast %cst_17 : f32 to vector<8x512xf32>
    %35 = arith.addf %21, %34 : vector<8x512xf32>
    %36 = arith.mulf %33, %35 : vector<8x512xf32>
    %cst_18 = arith.constant 6.000000e+00 : f32
    %37 = vector.broadcast %cst_18 : f32 to vector<8x512xf32>
    %38 = arith.addf %21, %37 : vector<8x512xf32>
    %39 = tpu.reciprocal %38 {approx = true} : vector<8x512xf32> -> vector<8x512xf32>
    %40 = arith.mulf %39, %39 : vector<8x512xf32>
    %cst_19 = arith.constant 7.93650805E-4 : f32
    %41 = vector.broadcast %cst_19 : f32 to vector<8x512xf32>
    %42 = arith.mulf %40, %41 : vector<8x512xf32>
    %cst_20 = arith.constant -0.00277777785 : f32
    %43 = vector.broadcast %cst_20 : f32 to vector<8x512xf32>
    %44 = arith.addf %43, %42 : vector<8x512xf32>
    %45 = arith.mulf %40, %44 : vector<8x512xf32>
    %cst_21 = arith.constant 0.0833333358 : f32
    %46 = vector.broadcast %cst_21 : f32 to vector<8x512xf32>
    %47 = arith.addf %46, %45 : vector<8x512xf32>
    %48 = arith.mulf %39, %47 : vector<8x512xf32>
    %cst_22 = arith.constant 5.000000e-01 : f32
    %49 = vector.broadcast %cst_22 : f32 to vector<8x512xf32>
    %50 = arith.subf %38, %49 : vector<8x512xf32>
    %51 = math.log %38 : vector<8x512xf32>
    %52 = arith.mulf %50, %51 : vector<8x512xf32>
    %53 = arith.subf %52, %38 : vector<8x512xf32>
    %cst_23 = arith.constant 0.918938517 : f32
    %54 = vector.broadcast %cst_23 : f32 to vector<8x512xf32>
    %55 = arith.addf %53, %54 : vector<8x512xf32>
    %56 = arith.addf %55, %48 : vector<8x512xf32>
    %57 = math.log %36 : vector<8x512xf32>
    %58 = arith.subf %56, %57 : vector<8x512xf32>
    %cst_24 = arith.constant 1.000000e+00 : f32
    %59 = vector.broadcast %cst_24 : f32 to vector<8x512xf32>
    %60 = arith.addf %3, %59 : vector<8x512xf32>
    %cst_25 = arith.constant 1.000000e+00 : f32
    %61 = vector.broadcast %cst_25 : f32 to vector<8x512xf32>
    %62 = arith.addf %60, %61 : vector<8x512xf32>
    %63 = arith.mulf %60, %62 : vector<8x512xf32>
    %cst_26 = arith.constant 2.000000e+00 : f32
    %64 = vector.broadcast %cst_26 : f32 to vector<8x512xf32>
    %65 = arith.addf %60, %64 : vector<8x512xf32>
    %66 = arith.mulf %63, %65 : vector<8x512xf32>
    %cst_27 = arith.constant 3.000000e+00 : f32
    %67 = vector.broadcast %cst_27 : f32 to vector<8x512xf32>
    %68 = arith.addf %60, %67 : vector<8x512xf32>
    %69 = arith.mulf %66, %68 : vector<8x512xf32>
    %cst_28 = arith.constant 4.000000e+00 : f32
    %70 = vector.broadcast %cst_28 : f32 to vector<8x512xf32>
    %71 = arith.addf %60, %70 : vector<8x512xf32>
    %72 = arith.mulf %69, %71 : vector<8x512xf32>
    %cst_29 = arith.constant 5.000000e+00 : f32
    %73 = vector.broadcast %cst_29 : f32 to vector<8x512xf32>
    %74 = arith.addf %60, %73 : vector<8x512xf32>
    %75 = arith.mulf %72, %74 : vector<8x512xf32>
    %cst_30 = arith.constant 6.000000e+00 : f32
    %76 = vector.broadcast %cst_30 : f32 to vector<8x512xf32>
    %77 = arith.addf %60, %76 : vector<8x512xf32>
    %78 = tpu.reciprocal %77 {approx = true} : vector<8x512xf32> -> vector<8x512xf32>
    %79 = arith.mulf %78, %78 : vector<8x512xf32>
    %cst_31 = arith.constant 7.93650805E-4 : f32
    %80 = vector.broadcast %cst_31 : f32 to vector<8x512xf32>
    %81 = arith.mulf %79, %80 : vector<8x512xf32>
    %cst_32 = arith.constant -0.00277777785 : f32
    %82 = vector.broadcast %cst_32 : f32 to vector<8x512xf32>
    %83 = arith.addf %82, %81 : vector<8x512xf32>
    %84 = arith.mulf %79, %83 : vector<8x512xf32>
    %cst_33 = arith.constant 0.0833333358 : f32
    %85 = vector.broadcast %cst_33 : f32 to vector<8x512xf32>
    %86 = arith.addf %85, %84 : vector<8x512xf32>
    %87 = arith.mulf %78, %86 : vector<8x512xf32>
    %cst_34 = arith.constant 5.000000e-01 : f32
    %88 = vector.broadcast %cst_34 : f32 to vector<8x512xf32>
    %89 = arith.subf %77, %88 : vector<8x512xf32>
    %90 = math.log %77 : vector<8x512xf32>
    %91 = arith.mulf %89, %90 : vector<8x512xf32>
    %92 = arith.subf %91, %77 : vector<8x512xf32>
    %cst_35 = arith.constant 0.918938517 : f32
    %93 = vector.broadcast %cst_35 : f32 to vector<8x512xf32>
    %94 = arith.addf %92, %93 : vector<8x512xf32>
    %95 = arith.addf %94, %87 : vector<8x512xf32>
    %96 = math.log %75 : vector<8x512xf32>
    %97 = arith.subf %95, %96 : vector<8x512xf32>
    %98 = arith.addf %58, %97 : vector<8x512xf32>
    %99 = arith.addf %3, %8 : vector<8x512xf32>
    %cst_36 = arith.constant 1.000000e-10 : f32
    %100 = vector.broadcast %cst_36 : f32 to vector<8x512xf32>
    %101 = arith.addf %99, %100 : vector<8x512xf32>
    %cst_37 = arith.constant 1.000000e+00 : f32
    %102 = vector.broadcast %cst_37 : f32 to vector<8x512xf32>
    %103 = arith.addf %101, %102 : vector<8x512xf32>
    %104 = arith.mulf %101, %103 : vector<8x512xf32>
    %cst_38 = arith.constant 2.000000e+00 : f32
    %105 = vector.broadcast %cst_38 : f32 to vector<8x512xf32>
    %106 = arith.addf %101, %105 : vector<8x512xf32>
    %107 = arith.mulf %104, %106 : vector<8x512xf32>
    %cst_39 = arith.constant 3.000000e+00 : f32
    %108 = vector.broadcast %cst_39 : f32 to vector<8x512xf32>
    %109 = arith.addf %101, %108 : vector<8x512xf32>
    %110 = arith.mulf %107, %109 : vector<8x512xf32>
    %cst_40 = arith.constant 4.000000e+00 : f32
    %111 = vector.broadcast %cst_40 : f32 to vector<8x512xf32>
    %112 = arith.addf %101, %111 : vector<8x512xf32>
    %113 = arith.mulf %110, %112 : vector<8x512xf32>
    %cst_41 = arith.constant 5.000000e+00 : f32
    %114 = vector.broadcast %cst_41 : f32 to vector<8x512xf32>
    %115 = arith.addf %101, %114 : vector<8x512xf32>
    %116 = arith.mulf %113, %115 : vector<8x512xf32>
    %cst_42 = arith.constant 6.000000e+00 : f32
    %117 = vector.broadcast %cst_42 : f32 to vector<8x512xf32>
    %118 = arith.addf %101, %117 : vector<8x512xf32>
    %119 = tpu.reciprocal %118 {approx = true} : vector<8x512xf32> -> vector<8x512xf32>
    %120 = arith.mulf %119, %119 : vector<8x512xf32>
    %cst_43 = arith.constant 7.93650805E-4 : f32
    %121 = vector.broadcast %cst_43 : f32 to vector<8x512xf32>
    %122 = arith.mulf %120, %121 : vector<8x512xf32>
    %cst_44 = arith.constant -0.00277777785 : f32
    %123 = vector.broadcast %cst_44 : f32 to vector<8x512xf32>
    %124 = arith.addf %123, %122 : vector<8x512xf32>
    %125 = arith.mulf %120, %124 : vector<8x512xf32>
    %cst_45 = arith.constant 0.0833333358 : f32
    %126 = vector.broadcast %cst_45 : f32 to vector<8x512xf32>
    %127 = arith.addf %126, %125 : vector<8x512xf32>
    %128 = arith.mulf %119, %127 : vector<8x512xf32>
    %cst_46 = arith.constant 5.000000e-01 : f32
    %129 = vector.broadcast %cst_46 : f32 to vector<8x512xf32>
    %130 = arith.subf %118, %129 : vector<8x512xf32>
    %131 = math.log %118 : vector<8x512xf32>
    %132 = arith.mulf %130, %131 : vector<8x512xf32>
    %133 = arith.subf %132, %118 : vector<8x512xf32>
    %cst_47 = arith.constant 0.918938517 : f32
    %134 = vector.broadcast %cst_47 : f32 to vector<8x512xf32>
    %135 = arith.addf %133, %134 : vector<8x512xf32>
    %136 = arith.addf %135, %128 : vector<8x512xf32>
    %137 = math.log %116 : vector<8x512xf32>
    %138 = arith.subf %136, %137 : vector<8x512xf32>
    %139 = arith.subf %98, %138 : vector<8x512xf32>
    %140 = arith.addf %8, %3 : vector<8x512xf32>
    %141 = arith.subf %19, %12 : vector<8x512xf32>
    %142 = arith.mulf %140, %141 : vector<8x512xf32>
    %143 = arith.subf %12, %15 : vector<8x512xf32>
    %144 = arith.mulf %3, %143 : vector<8x512xf32>
    %145 = arith.addf %142, %144 : vector<8x512xf32>
    %146 = arith.addf %139, %145 : vector<8x512xf32>
    %cst_48 = arith.constant 1.000000e+00 : f32
    %147 = vector.broadcast %cst_48 : f32 to vector<8x512xf32>
    %148 = arith.subf %147, %9 : vector<8x512xf32>
    %cst_49 = arith.constant 1.000000e-10 : f32
    %149 = vector.broadcast %cst_49 : f32 to vector<8x512xf32>
    %150 = arith.addf %148, %149 : vector<8x512xf32>
    %151 = math.log %150 : vector<8x512xf32>
    %152 = arith.subf %146, %151 : vector<8x512xf32>
    %153 = arith.subf %12, %19 : vector<8x512xf32>
    %154 = arith.mulf %8, %153 : vector<8x512xf32>
    %155 = math.exp %154 : vector<8x512xf32>
    %cst_50 = arith.constant 1.000000e+00 : f32
    %156 = vector.broadcast %cst_50 : f32 to vector<8x512xf32>
    %157 = arith.subf %156, %9 : vector<8x512xf32>
    %158 = arith.mulf %157, %155 : vector<8x512xf32>
    %159 = arith.addf %9, %158 : vector<8x512xf32>
    %cst_51 = arith.constant 1.000000e-10 : f32
    %160 = vector.broadcast %cst_51 : f32 to vector<8x512xf32>
    %161 = arith.addf %159, %160 : vector<8x512xf32>
    %162 = math.log %161 : vector<8x512xf32>
    %cst_52 = arith.constant 0.000000e+00 : f32
    %163 = vector.broadcast %cst_52 : f32 to vector<8x512xf32>
    %164 = arith.subf %163, %162 : vector<8x512xf32>
    %cst_53 = arith.constant 9.99999993E-9 : f32
    %165 = vector.broadcast %cst_53 : f32 to vector<8x512xf32>
    %166 = arith.cmpf ole, %3, %165 : vector<8x512xf32>
    %167 = arith.select %166, %164, %152 : vector<8x512xi1>, vector<8x512xf32>
    %c0_54 = arith.constant 0 : index
    %c0_55 = arith.constant 0 : index
    %168 = vector.load %arg8[%c0_54, %c0_55] : memref<8x512xf32, #tpu.memory_space<vmem>>, vector<8x512xf32>
    %169 = arith.addf %168, %167 : vector<8x512xf32>
    %c0_56 = arith.constant 0 : index
    %c0_57 = arith.constant 0 : index
    %170 = vector.load %arg8[%c0_56, %c0_57] : memref<8x512xf32, #tpu.memory_space<vmem>>, vector<8x512xf32>
    tpu.vector_store %arg8[%c0_56, %c0_57], %169 {strides = array<i32>} : memref<8x512xf32, #tpu.memory_space<vmem>>, vector<8x512xf32>,
    %c1_i32 = arith.constant 1 : i32
    %171 = arith.cmpi eq, %arg1, %c1_i32 : i32
    %172 = arith.extui %171 : i1 to i32
    %c0_i32_58 = arith.constant 0 : i32
    %173 = arith.cmpi ne, %172, %c0_i32_58 : i32
    scf.if %173 {
      %c0_59 = arith.constant 0 : index
      %c0_60 = arith.constant 0 : index
      %174 = vector.load %arg8[%c0_59, %c0_60] : memref<8x512xf32, #tpu.memory_space<vmem>>, vector<8x128xf32>
      %c0_61 = arith.constant 0 : index
      %c128 = arith.constant 128 : index
      %175 = vector.load %arg8[%c0_61, %c128] : memref<8x512xf32, #tpu.memory_space<vmem>>, vector<8x128xf32>
      %176 = arith.addf %174, %175 : vector<8x128xf32>
      %c0_62 = arith.constant 0 : index
      %c256 = arith.constant 256 : index
      %177 = vector.load %arg8[%c0_62, %c256] : memref<8x512xf32, #tpu.memory_space<vmem>>, vector<8x128xf32>
      %178 = arith.addf %176, %177 : vector<8x128xf32>
      %c0_63 = arith.constant 0 : index
      %c384 = arith.constant 384 : index
      %179 = vector.load %arg8[%c0_63, %c384] : memref<8x512xf32, #tpu.memory_space<vmem>>, vector<8x128xf32>
      %180 = arith.addf %178, %179 : vector<8x128xf32>
      %181 = vector.shape_cast %180 : vector<8x128xf32> to vector<1x8x128xf32>
      %c0_64 = arith.constant 0 : index
      %c0_65 = arith.constant 0 : index
      %c0_66 = arith.constant 0 : index
      %182 = vector.load %arg7[%c0_64, %c0_65, %c0_66] : memref<1x8x128xf32, #tpu.memory_space<vmem>>, vector<1x8x128xf32>
      tpu.vector_store %arg7[%c0_64, %c0_65, %c0_66], %181 {strides = array<i32>} : memref<1x8x128xf32, #tpu.memory_space<vmem>>, vector<1x8x128xf32>,
    } else {
    }
    return
  }
  func.func @transform_0(%arg0: i32, %arg1: i32) -> (i32, i32) {
    %c0_i32 = arith.constant 0 : i32
    %c0_i32_0 = arith.constant 0 : i32
    %c0_i32_1 = arith.constant 0 : i32
    return %c0_i32, %c0_i32_0 : i32, i32
  }
  func.func @transform_1(%arg0: i32, %arg1: i32) -> (i32, i32) {
    %c2_i32 = arith.constant 2 : i32
    %0 = arith.muli %arg0, %c2_i32 : i32
    %1 = arith.addi %0, %arg1 : i32
    %c0_i32 = arith.constant 0 : i32
    %c0_i32_0 = arith.constant 0 : i32
    return %c0_i32, %1 : i32, i32
  }
  func.func @transform_2(%arg0: i32, %arg1: i32) -> (i32, i32) {
    %c2_i32 = arith.constant 2 : i32
    %0 = arith.muli %arg0, %c2_i32 : i32
    %1 = arith.addi %0, %arg1 : i32
    %c0_i32 = arith.constant 0 : i32
    %c0_i32_0 = arith.constant 0 : i32
    return %c0_i32, %1 : i32, i32
  }
  func.func @transform_3(%arg0: i32, %arg1: i32) -> (i32, i32) {
    %c2_i32 = arith.constant 2 : i32
    %0 = arith.muli %arg0, %c2_i32 : i32
    %1 = arith.addi %0, %arg1 : i32
    %c0_i32 = arith.constant 0 : i32
    %c0_i32_0 = arith.constant 0 : i32
    return %c0_i32, %1 : i32, i32
  }
  func.func @transform_4(%arg0: i32, %arg1: i32) -> (i32, i32) {
    %c2_i32 = arith.constant 2 : i32
    %0 = arith.muli %arg0, %c2_i32 : i32
    %1 = arith.addi %0, %arg1 : i32
    %c0_i32 = arith.constant 0 : i32
    %c0_i32_0 = arith.constant 0 : i32
    return %c0_i32, %1 : i32, i32
  }
  func.func @transform_5(%arg0: i32, %arg1: i32) -> (i32, i32, i32) {
    %c0_i32 = arith.constant 0 : i32
    %c0_i32_0 = arith.constant 0 : i32
    %c0_i32_1 = arith.constant 0 : i32
    return %arg0, %c0_i32, %c0_i32_0 : i32, i32, i32
  }
}

</mosaic_0001>

<llo_original>
// kernel: tpu_custom_call.1
$region0: #{tpu_custom_call.1}
  #allocation0 [shape = 'u32[]', space=smem, size = 0x4, offset = 0x4, fixed_abs, tag = 'smem constant byte address 0x4 - core index']
  #allocation1 [shape = 'u32[144,128]{1,0:T(1,128)}', space=vmem, size = 0x12000, scoped, tag = 'internal scratch']
  #allocation2 [shape = 'f32[8,512]{1,0:T(8,128)}', space=vmem, size = 0x4000, scoped, tag = 'scratch operand']
  %s0 = inlined_call_operand.vmem [shape: f32[8,1], index: 0, kind: input, shape index: {}]
  %s1 = inlined_call_operand.hbm [shape: f32[8,2048], index: 1, kind: input, shape index: {}]
  %s2 = inlined_call_operand.hbm [shape: f32[8,2048], index: 2, kind: input, shape index: {}]
  %s3 = inlined_call_operand.hbm [shape: f32[8,2048], index: 3, kind: input, shape index: {}]
  %s4 = inlined_call_operand.hbm [shape: f32[8,2048], index: 4, kind: input, shape index: {}]
  %s5 = inlined_call_operand.hbm [shape: f32[2,8,128], index: 5, kind: output, shape index: {}]
  %s6 = sld [smem:[#allocation0]]
  $region77: #{tpu_custom_call.1} parent=0
    _
  %s8 = ssub.s32 1, %s6
  %s9 = scalar_select 0, %s8, %s6
  $region1: #{tpu_custom_call.1} parent=0
    #allocation3 [shape = 'u8[32768]{0}', space=vmem, size = 0x8000, scoped, tag = 'input window, operand 1']
    #allocation4 [shape = 's32[2]{0}', space=sflag, size = 0x8, scoped, tag = 'scoped memory for tpu_custom_call.1']
    #allocation5 [shape = 's32[2]{0}', space=sflag, size = 0x8, scoped, tag = 'scoped memory for tpu_custom_call.1']
    #allocation6 [shape = 'u8[32768]{0}', space=vmem, size = 0x8000, scoped, tag = 'input window, operand 2']
    #allocation7 [shape = 's32[2]{0}', space=sflag, size = 0x8, scoped, tag = 'scoped memory for tpu_custom_call.1']
    #allocation8 [shape = 'u8[32768]{0}', space=vmem, size = 0x8000, scoped, tag = 'input window, operand 3']
    #allocation9 [shape = 'u8[32768]{0}', space=vmem, size = 0x8000, scoped, tag = 'input window, operand 4']
    #allocation10 [shape = 's32[2]{0}', space=sflag, size = 0x8, scoped, tag = 'scoped memory for tpu_custom_call.1']
    #allocation11 [shape = 'u8[8192]{0}', space=vmem, size = 0x2000, scoped, tag = 'output window, operand 0']
    %10 = vsyncpa [#allocation4], 0
    %s11 = scalar_lea.sflag [#allocation4], 1
    %12 = vsyncpa %s11, 0
    %13 = vsyncpa [#allocation7], 0
    %s14 = scalar_lea.sflag [#allocation7], 1
    %15 = vsyncpa %s14, 0
    %16 = vsyncpa [#allocation10], 0
    %s17 = scalar_lea.sflag [#allocation10], 1
    %18 = vsyncpa %s17, 0
    %19 = vsyncpa [#allocation5], 0
    %s20 = scalar_lea.sflag [#allocation5], 1
    %21 = vsyncpa %s20, 0
    loop: start=0, step=1, limit=6
    $region2: #{tpu_custom_call.1} parent=1 // loop_pre_header
      _
    $region3: #{tpu_custom_call.1} parent=1 // loop_header
      %s23 = sphi 0, %s27
      %p24 = scmp.ge.s32.totalorder %s23, 6
      %s30 = sphi 0, %s42
      %s31 = sphi 0, %s38
      %s32 = sphi 0, %s30
      %s33 = sphi 0, %s31
      %s34 = sphi 0, %s32
      %s35 = sphi 0, %s33
      %s43 = sphi 0, %s43
      %s45 = sphi 0, %s43
      %s46 = sphi 0, %s45
      %s60 = sphi 0, %s46
      %s70 = sphi 0, %s72
      %s73 = sphi 0, %s70
      %s74 = sphi 0, %s73
      %s90 = sphi 0, %s74
      %s100 = sphi 0, %s102
      %s103 = sphi 0, %s100
      %s104 = sphi 0, %s103
      %s120 = sphi 0, %s104
      %s130 = sphi 0, %s132
      %s133 = sphi 0, %s130
      %s134 = sphi 0, %s133
      %s150 = sphi 0, %s134
      %s160 = sphi 0, %s162
      %s163 = sphi 0, %s160
      %s164 = sphi 0, %s163
      %s180 = sphi 0, %s164
      %s186 = sphi 0, %s188
      %s189 = sphi 0, %s186
      %s190 = sphi 0, %s189
      %s206 = sphi 0, %s190
    $region4: #{tpu_custom_call.1} parent=1 // loop_header_branch
      %26 = sbr.rel (%p24) target = $region8
    $region5: #{tpu_custom_call.1} parent=1 // loop_body
      %s28 = ssub.s32 %s23, 1
      %s29 = ssub.s32 %s23, 2
      %s36 = sadd.s32 1, %s31
      %p37 = scmp.ge.s32.totalorder %s36, 2
      %s38 = scalar_select %p37, 0, %s36
      %s39 = sadd.s32 1, %s30
      %s40 = scalar_select %p37, %s39, %s30
      %p41 = scmp.ge.s32.totalorder %s40, 2
      %s42 = scalar_select %p41, 0, %s40
      %s44 = sadd.s32 %s43, 1
      %p47 = scmp.eq.s32.totalorder %s23, 3
      %p48 = scmp.ne.s32.totalorder %s43, %s45
      %p49 = scmp.eq.s32.totalorder %s23, 0
      %p50 = por %p48, %p49
      %p51 = scmp.ne.s32.totalorder %s43, %s45
      %p52 = scmp.eq.s32.totalorder %s28, 3
      %p53 = por %p51, %p52
      %p54 = scmp.ne.s32.totalorder %s45, %s46
      %p55 = scmp.eq.s32.totalorder %s28, 0
      %p56 = por %p54, %p55
      %p57 = scmp.ne.s32.totalorder %s45, %s46
      %p58 = scmp.eq.s32.totalorder %s29, 3
      %p59 = por %p57, %p58
      %p61 = scmp.ne.s32.totalorder %s46, %s60
      %p62 = scmp.eq.s32.totalorder %s29, 0
      %p63 = por %p61, %p62
      %s64 = smul.u32 %s30, 2
      %s65 = sadd.s32 %s64, %s31
      %s66 = smul.u32 %s42, 2
      %s67 = sadd.s32 %s66, %s38
      %s68 = ssub.s32 %s65, %s67
      %p69 = scmp.eq.s32.totalorder %s68, 0
      %s71 = sadd.s32 %s70, 1
      %s72 = scalar_select %p69, %s70, %s71
      %p75 = pneg %p69
      %p76 = scmp.eq.s32.totalorder %s23, 3
      %p77 = por %p75, %p76
      %p78 = scmp.ne.s32.totalorder %s70, %s73
      %p79 = scmp.eq.s32.totalorder %s23, 0
      %p80 = por %p78, %p79
      %p81 = scmp.ne.s32.totalorder %s70, %s73
      %p82 = scmp.eq.s32.totalorder %s28, 3
      %p83 = por %p81, %p82
      %p84 = scmp.ne.s32.totalorder %s73, %s74
      %p85 = scmp.eq.s32.totalorder %s28, 0
      %p86 = por %p84, %p85
      %p87 = scmp.ne.s32.totalorder %s73, %s74
      %p88 = scmp.eq.s32.totalorder %s29, 3
      %p89 = por %p87, %p88
      %p91 = scmp.ne.s32.totalorder %s74, %s90
      %p92 = scmp.eq.s32.totalorder %s29, 0
      %p93 = por %p91, %p92
      %s94 = smul.u32 %s30, 2
      %s95 = sadd.s32 %s94, %s31
      %s96 = smul.u32 %s42, 2
      %s97 = sadd.s32 %s96, %s38
      %s98 = ssub.s32 %s95, %s97
      %p99 = scmp.eq.s32.totalorder %s98, 0
      %s101 = sadd.s32 %s100, 1
      %s102 = scalar_select %p99, %s100, %s101
      %p105 = pneg %p99
      %p106 = scmp.eq.s32.totalorder %s23, 3
      %p107 = por %p105, %p106
      %p108 = scmp.ne.s32.totalorder %s100, %s103
      %p109 = scmp.eq.s32.totalorder %s23, 0
      %p110 = por %p108, %p109
      %p111 = scmp.ne.s32.totalorder %s100, %s103
      %p112 = scmp.eq.s32.totalorder %s28, 3
      %p113 = por %p111, %p112
      %p114 = scmp.ne.s32.totalorder %s103, %s104
      %p115 = scmp.eq.s32.totalorder %s28, 0
      %p116 = por %p114, %p115
      %p117 = scmp.ne.s32.totalorder %s103, %s104
      %p118 = scmp.eq.s32.totalorder %s29, 3
      %p119 = por %p117, %p118
      %p121 = scmp.ne.s32.totalorder %s104, %s120
      %p122 = scmp.eq.s32.totalorder %s29, 0
      %p123 = por %p121, %p122
      %s124 = smul.u32 %s30, 2
      %s125 = sadd.s32 %s124, %s31
      %s126 = smul.u32 %s42, 2
      %s127 = sadd.s32 %s126, %s38
      %s128 = ssub.s32 %s125, %s127
      %p129 = scmp.eq.s32.totalorder %s128, 0
      %s131 = sadd.s32 %s130, 1
      %s132 = scalar_select %p129, %s130, %s131
      %p135 = pneg %p129
      %p136 = scmp.eq.s32.totalorder %s23, 3
      %p137 = por %p135, %p136
      %p138 = scmp.ne.s32.totalorder %s130, %s133
      %p139 = scmp.eq.s32.totalorder %s23, 0
      %p140 = por %p138, %p139
      %p141 = scmp.ne.s32.totalorder %s130, %s133
      %p142 = scmp.eq.s32.totalorder %s28, 3
      %p143 = por %p141, %p142
      %p144 = scmp.ne.s32.totalorder %s133, %s134
      %p145 = scmp.eq.s32.totalorder %s28, 0
      %p146 = por %p144, %p145
      %p147 = scmp.ne.s32.totalorder %s133, %s134
      %p148 = scmp.eq.s32.totalorder %s29, 3
      %p149 = por %p147, %p148
      %p151 = scmp.ne.s32.totalorder %s134, %s150
      %p152 = scmp.eq.s32.totalorder %s29, 0
      %p153 = por %p151, %p152
      %s154 = smul.u32 %s30, 2
      %s155 = sadd.s32 %s154, %s31
      %s156 = smul.u32 %s42, 2
      %s157 = sadd.s32 %s156, %s38
      %s158 = ssub.s32 %s155, %s157
      %p159 = scmp.eq.s32.totalorder %s158, 0
      %s161 = sadd.s32 %s160, 1
      %s162 = scalar_select %p159, %s160, %s161
      %p165 = pneg %p159
      %p166 = scmp.eq.s32.totalorder %s23, 3
      %p167 = por %p165, %p166
      %p168 = scmp.ne.s32.totalorder %s160, %s163
      %p169 = scmp.eq.s32.totalorder %s23, 0
      %p170 = por %p168, %p169
      %p171 = scmp.ne.s32.totalorder %s160, %s163
      %p172 = scmp.eq.s32.totalorder %s28, 3
      %p173 = por %p171, %p172
      %p174 = scmp.ne.s32.totalorder %s163, %s164
      %p175 = scmp.eq.s32.totalorder %s28, 0
      %p176 = por %p174, %p175
      %p177 = scmp.ne.s32.totalorder %s163, %s164
      %p178 = scmp.eq.s32.totalorder %s29, 3
      %p179 = por %p177, %p178
      %p181 = scmp.ne.s32.totalorder %s164, %s180
      %p182 = scmp.eq.s32.totalorder %s29, 0
      %p183 = por %p181, %p182
      %s184 = ssub.s32 %s30, %s42
      %p185 = scmp.eq.s32.totalorder %s184, 0
      %s187 = sadd.s32 %s186, 1
      %s188 = scalar_select %p185, %s186, %s187
      %p191 = pneg %p185
      %p192 = scmp.eq.s32.totalorder %s23, 3
      %p193 = por %p191, %p192
      %p194 = scmp.ne.s32.totalorder %s186, %s189
      %p195 = scmp.eq.s32.totalorder %s23, 0
      %p196 = por %p194, %p195
      %p197 = scmp.ne.s32.totalorder %s186, %s189
      %p198 = scmp.eq.s32.totalorder %s28, 3
      %p199 = por %p197, %p198
      %p200 = scmp.ne.s32.totalorder %s189, %s190
      %p201 = scmp.eq.s32.totalorder %s28, 0
      %p202 = por %p200, %p201
      %p203 = scmp.ne.s32.totalorder %s189, %s190
      %p204 = scmp.eq.s32.totalorder %s29, 3
      %p205 = por %p203, %p204
      %p207 = scmp.ne.s32.totalorder %s190, %s206
      %p208 = scmp.eq.s32.totalorder %s29, 0
      %p209 = por %p207, %p208
      %p210 = scmp.le.s32.totalorder 1, %s23
      %p211 = scmp.lt.s32.totalorder %s23, 5
      %p212 = pnand %p210, %p211
      %p213 = pneg %p212
      // Predicated region
      $region9: #{tpu_custom_call.1} parent=5 // pred_check
        _
      $region10: #{tpu_custom_call.1} parent=5 // pred_check_branch
        %215 = sbr.rel (%p212) target = $region12
      $region11: #{tpu_custom_call.1} parent=5 // pred_region
        %s216 = ssub.s32 %s23, 1
        // Predicated region
        $region13: #{tpu_custom_call.1} parent=11 // pred_check
          %p217 = pneg %p56
        $region14: #{tpu_custom_call.1} parent=11 // pred_check_branch
          %219 = sbr.rel (%p217) target = $region16
        $region15: #{tpu_custom_call.1} parent=11 // pred_region
          _
        $region16: #{tpu_custom_call.1} parent=11 // pred_fallthru
          _
      $region12: #{tpu_custom_call.1} parent=5 // pred_fallthru
        _
      %p220 = scmp.lt.s32.totalorder %s23, 4
      // Predicated region
      $region17: #{tpu_custom_call.1} parent=5 // pred_check
        %p221 = pneg %p220
      $region18: #{tpu_custom_call.1} parent=5 // pred_check_branch
        %223 = sbr.rel (%p221) target = $region20
      $region19: #{tpu_custom_call.1} parent=5 // pred_region
        // Predicated region
        $region21: #{tpu_custom_call.1} parent=19 // pred_check
          %p224 = pneg %p80
        $region22: #{tpu_custom_call.1} parent=19 // pred_check_branch
          %226 = sbr.rel (%p224) target = $region24
        $region23: #{tpu_custom_call.1} parent=19 // pred_region
          %s227 = sand.u32 %s70, 1
          %s228 = scalar_lea.sflag [#allocation4], %s227
          %s229 = sand.u32 %s70, 1
          %s230 = smul.addr %s229, 32
          %s231 = scalar_lea.vmem [#allocation3], %s230
          %s232 = smul.u32 %s30, 2
          %s233 = sadd.s32 %s232, %s31
          %s234 = smul.u32 4, %s233
          %s236 = ssub.s32 512, 512
          %237 = vsyncadd %s228, %s236
          %s238 = smul.addr %s234, 128
          %s239 = scalar_lea.hbm %s1, %s238
          %s241 = sshll.u32 %s231, 4
          %s242 = int_to_ptr.vmem [resolvable:$true] %s241
          %244 = dma.hbm_to_vmem [thread:$0]  %s239, 512, %s242, %s228
        $region24: #{tpu_custom_call.1} parent=19 // pred_fallthru
          _
        // Predicated region
        $region25: #{tpu_custom_call.1} parent=19 // pred_check
          %p245 = pneg %p110
        $region26: #{tpu_custom_call.1} parent=19 // pred_check_branch
          %247 = sbr.rel (%p245) target = $region28
        $region27: #{tpu_custom_call.1} parent=19 // pred_region
          %s248 = sand.u32 %s23, 1
          %s249 = scalar_lea.sflag [#allocation7], %s248
          %s250 = sand.u32 %s100, 1
          %s251 = smul.addr %s250, 32
          %s252 = scalar_lea.vmem [#allocation6], %s251
          %s253 = smul.u32 %s30, 2
          %s254 = sadd.s32 %s253, %s31
          %s255 = smul.u32 4, %s254
          %s257 = ssub.s32 512, 512
          %258 = vsyncadd %s249, %s257
          %s259 = smul.addr %s255, 128
          %s260 = scalar_lea.hbm %s2, %s259
          %s262 = sshll.u32 %s252, 4
          %s263 = int_to_ptr.vmem [resolvable:$true] %s262
          %265 = dma.hbm_to_vmem [thread:$0]  %s260, 512, %s263, %s249
        $region28: #{tpu_custom_call.1} parent=19 // pred_fallthru
          _
        // Predicated region
        $region29: #{tpu_custom_call.1} parent=19 // pred_check
          %p266 = pneg %p140
        $region30: #{tpu_custom_call.1} parent=19 // pred_check_branch
          %268 = sbr.rel (%p266) target = $region32
        $region31: #{tpu_custom_call.1} parent=19 // pred_region
          %s269 = sand.u32 %s23, 1
          %s270 = scalar_lea.sflag [#allocation7], %s269
          %s271 = sand.u32 %s130, 1
          %s272 = smul.addr %s271, 32
          %s273 = scalar_lea.vmem [#allocation8], %s272
          %s274 = smul.u32 %s30, 2
          %s275 = sadd.s32 %s274, %s31
          %s276 = smul.u32 4, %s275
          %s278 = ssub.s32 512, 512
          %279 = vsyncadd %s270, %s278
          %s280 = smul.addr %s276, 128
          %s281 = scalar_lea.hbm %s3, %s280
          %s283 = sshll.u32 %s273, 4
          %s284 = int_to_ptr.vmem [resolvable:$true] %s283
          %286 = dma.hbm_to_vmem [thread:$0]  %s281, 512, %s284, %s270
        $region32: #{tpu_custom_call.1} parent=19 // pred_fallthru
          _
        // Predicated region
        $region33: #{tpu_custom_call.1} parent=19 // pred_check
          %p287 = pneg %p170
        $region34: #{tpu_custom_call.1} parent=19 // pred_check_branch
          %289 = sbr.rel (%p287) target = $region36
        $region35: #{tpu_custom_call.1} parent=19 // pred_region
          %s290 = sand.u32 %s160, 1
          %s291 = scalar_lea.sflag [#allocation10], %s290
          %s292 = sand.u32 %s160, 1
          %s293 = smul.addr %s292, 32
          %s294 = scalar_lea.vmem [#allocation9], %s293
          %s295 = smul.u32 %s30, 2
          %s296 = sadd.s32 %s295, %s31
          %s297 = smul.u32 4, %s296
          %s299 = ssub.s32 512, 512
          %300 = vsyncadd %s291, %s299
          %s301 = smul.addr %s297, 128
          %s302 = scalar_lea.hbm %s4, %s301
          %s304 = sshll.u32 %s294, 4
          %s305 = int_to_ptr.vmem [resolvable:$true] %s304
          %307 = dma.hbm_to_vmem [thread:$0]  %s302, 512, %s305, %s291
        $region36: #{tpu_custom_call.1} parent=19 // pred_fallthru
          _
      $region20: #{tpu_custom_call.1} parent=5 // pred_fallthru
        _
      %p308 = scmp.le.s32.totalorder 1, %s23
      %p309 = scmp.lt.s32.totalorder %s23, 5
      %p310 = pnand %p308, %p309
      %p311 = pneg %p310
      // Predicated region
      $region37: #{tpu_custom_call.1} parent=5 // pred_check
        _
      $region38: #{tpu_custom_call.1} parent=5 // pred_check_branch
        %313 = sbr.rel (%p310) target = $region40
      $region39: #{tpu_custom_call.1} parent=5 // pred_region
        %s314 = ssub.s32 %s23, 1
        %s315 = sand.u32 %s73, 1
        %s316 = scalar_lea.sflag [#allocation4], %s315
        %s317 = sand.u32 %s73, 1
        %s318 = smul.addr %s317, 32
        %s319 = scalar_lea.vmem [#allocation3], %s318
        // Predicated region
        $region41: #{tpu_custom_call.1} parent=39 // pred_check
          %p320 = pneg %p86
        $region42: #{tpu_custom_call.1} parent=39 // pred_check_branch
          %322 = sbr.rel (%p320) target = $region44
        $region43: #{tpu_custom_call.1} parent=39 // pred_region
          %323 = dma.done %s316, 512
        $region44: #{tpu_custom_call.1} parent=39 // pred_fallthru
          _
        %s324 = sand.u32 %s28, 1
        %s325 = scalar_lea.sflag [#allocation7], %s324
        %s326 = sand.u32 %s103, 1
        %s327 = smul.addr %s326, 32
        %s328 = scalar_lea.vmem [#allocation6], %s327
        // Predicated region
        $region45: #{tpu_custom_call.1} parent=39 // pred_check
          %p329 = pneg %p116
        $region46: #{tpu_custom_call.1} parent=39 // pred_check_branch
          %331 = sbr.rel (%p329) target = $region48
        $region47: #{tpu_custom_call.1} parent=39 // pred_region
          %332 = dma.done %s325, 512
        $region48: #{tpu_custom_call.1} parent=39 // pred_fallthru
          _
        %s333 = sand.u32 %s28, 1
        %s334 = scalar_lea.sflag [#allocation7], %s333
        %s335 = sand.u32 %s133, 1
        %s336 = smul.addr %s335, 32
        %s337 = scalar_lea.vmem [#allocation8], %s336
        // Predicated region
        $region49: #{tpu_custom_call.1} parent=39 // pred_check
          %p338 = pneg %p146
        $region50: #{tpu_custom_call.1} parent=39 // pred_check_branch
          %340 = sbr.rel (%p338) target = $region52
        $region51: #{tpu_custom_call.1} parent=39 // pred_region
          %341 = dma.done %s334, 512
        $region52: #{tpu_custom_call.1} parent=39 // pred_fallthru
          _
        %s342 = sand.u32 %s163, 1
        %s343 = scalar_lea.sflag [#allocation10], %s342
        %s344 = sand.u32 %s163, 1
        %s345 = smul.addr %s344, 32
        %s346 = scalar_lea.vmem [#allocation9], %s345
        // Predicated region
        $region53: #{tpu_custom_call.1} parent=39 // pred_check
          %p347 = pneg %p176
        $region54: #{tpu_custom_call.1} parent=39 // pred_check_branch
          %349 = sbr.rel (%p347) target = $region56
        $region55: #{tpu_custom_call.1} parent=39 // pred_region
          %350 = dma.done %s343, 512
        $region56: #{tpu_custom_call.1} parent=39 // pred_fallthru
          _
        %p351 = pneg %p56
        %p352 = pneg %p53
        %s353 = sand.u32 %s73, 1
        %s354 = scalar_lea.sflag [#allocation4], %s353
        %s355 = sand.u32 %s73, 1
        %s356 = smul.addr %s355, 32
        %s357 = scalar_lea.vmem [#allocation3], %s356
        %p358 = pneg %p86
        %p359 = pneg %p83
        %s360 = sand.u32 %s28, 1
        %s361 = scalar_lea.sflag [#allocation7], %s360
        %s362 = sand.u32 %s103, 1
        %s363 = smul.addr %s362, 32
        %s364 = scalar_lea.vmem [#allocation6], %s363
        %p365 = pneg %p116
        %p366 = pneg %p113
        %s367 = sand.u32 %s28, 1
        %s368 = scalar_lea.sflag [#allocation7], %s367
        %s369 = sand.u32 %s133, 1
        %s370 = smul.addr %s369, 32
        %s371 = scalar_lea.vmem [#allocation8], %s370
        %p372 = pneg %p146
        %p373 = pneg %p143
        %s374 = sand.u32 %s163, 1
        %s375 = scalar_lea.sflag [#allocation10], %s374
        %s376 = sand.u32 %s163, 1
        %s377 = smul.addr %s376, 32
        %s378 = scalar_lea.vmem [#allocation9], %s377
        %p379 = pneg %p176
        %p380 = pneg %p173
        %p381 = pneg %p202
        %p382 = pneg %p199
        %s383 = sand.u32 %s189, 1
        %s384 = scalar_lea.sflag [#allocation5], %s383
        %s385 = sand.u32 %s189, 1
        %s386 = smul.addr %s385, 8
        %s387 = scalar_lea.vmem [#allocation11], %s386
        %s388 = smul.u32 %s32, 2
        %s389 = sadd.s32 %s388, %s33
        %s390 = smul.u32 4, %s389
        %s391 = smul.u32 %s32, 2
        %s392 = sadd.s32 %s391, %s33
        %s393 = smul.u32 4, %s392
        %s394 = smul.u32 %s32, 2
        %s395 = sadd.s32 %s394, %s33
        %s396 = smul.u32 4, %s395
        %s397 = smul.u32 %s32, 2
        %s398 = sadd.s32 %s397, %s33
        %s399 = smul.u32 4, %s398
        %p400 = scmp.eq.s32.totalorder %s33, 0
        // Predicated region
        $region57: #{tpu_custom_call.1} parent=39 // pred_check
          %p401 = pneg %p400
        $region58: #{tpu_custom_call.1} parent=39 // pred_check_branch
          %403 = sbr.rel (%p401) target = $region60
        $region59: #{tpu_custom_call.1} parent=39 // pred_region
          %404 = vst [vmem:[#allocation2] sm:$0xff] 0.0
          %405 = vst [vmem:[#allocation2 + $0x8] sm:$0xff] 0.0
          %406 = vst [vmem:[#allocation2 + $0x10] sm:$0xff] 0.0
          %407 = vst [vmem:[#allocation2 + $0x18] sm:$0xff] 0.0
        $region60: #{tpu_custom_call.1} parent=39 // pred_fallthru
          _
        %v408 = vld [vmem:[%s319] sm:$0xff]
        %v409 = vld [vmem:[%s319 + $0x8] sm:$0xff]
        %v410 = vld [vmem:[%s319 + $0x10] sm:$0xff]
        %v411 = vld [vmem:[%s319 + $0x18] sm:$0xff]
        %v412 = vld [vmem:[%s328] sm:$0xff]
        %v413 = vld [vmem:[%s328 + $0x8] sm:$0xff]
        %v414 = vld [vmem:[%s328 + $0x10] sm:$0xff]
        %v415 = vld [vmem:[%s328 + $0x18] sm:$0xff]
        %v416 = vld [vmem:[%s0] sm:$0xff]
        %418 = vset.pattern.permute.xlu0 0
        %419 = vperm.xlu0 %418, %v416
        %v420 = vpop.permute.xlu0 %419
        %v422 = vmul.f32 %v412, %v420
        %v423 = vmul.f32 %v413, %v420
        %v424 = vmul.f32 %v414, %v420
        %v425 = vmul.f32 %v415, %v420
        %v426 = vld [vmem:[%s337] sm:$0xff]
        %v427 = vld [vmem:[%s337 + $0x8] sm:$0xff]
        %v428 = vld [vmem:[%s337 + $0x10] sm:$0xff]
        %v429 = vld [vmem:[%s337 + $0x18] sm:$0xff]
        %v430 = vld [vmem:[%s346] sm:$0xff]
        %v431 = vld [vmem:[%s346 + $0x8] sm:$0xff]
        %v432 = vld [vmem:[%s346 + $0x10] sm:$0xff]
        %v433 = vld [vmem:[%s346 + $0x18] sm:$0xff]
        %v434 = vadd.f32 %v426, 1e-10
        %v435 = vadd.f32 %v427, 1e-10
        %v436 = vadd.f32 %v428, 1e-10
        %v437 = vadd.f32 %v429, 1e-10
        %v438 = vlog2.pop %v434
        %v439 = vmul.f32 %v438, 0.6931472
        %v440 = vlog2.pop %v435
        %v441 = vmul.f32 %v440, 0.6931472
        %v442 = vlog2.pop %v436
        %v443 = vmul.f32 %v442, 0.6931472
        %v444 = vlog2.pop %v437
        %v445 = vmul.f32 %v444, 0.6931472
        %v446 = vadd.f32 %v422, 1e-10
        %v447 = vadd.f32 %v423, 1e-10
        %v448 = vadd.f32 %v424, 1e-10
        %v449 = vadd.f32 %v425, 1e-10
        %v450 = vlog2.pop %v446
        %v451 = vmul.f32 %v450, 0.6931472
        %v452 = vlog2.pop %v447
        %v453 = vmul.f32 %v452, 0.6931472
        %v454 = vlog2.pop %v448
        %v455 = vmul.f32 %v454, 0.6931472
        %v456 = vlog2.pop %v449
        %v457 = vmul.f32 %v456, 0.6931472
        %v458 = vadd.f32 %v426, %v422
        %v459 = vadd.f32 %v427, %v423
        %v460 = vadd.f32 %v428, %v424
        %v461 = vadd.f32 %v429, %v425
        %v462 = vadd.f32 %v458, 1e-10
        %v463 = vadd.f32 %v459, 1e-10
        %v464 = vadd.f32 %v460, 1e-10
        %v465 = vadd.f32 %v461, 1e-10
        %v466 = vlog2.pop %v462
        %v467 = vmul.f32 %v466, 0.6931472
        %v468 = vlog2.pop %v463
        %v469 = vmul.f32 %v468, 0.6931472
        %v470 = vlog2.pop %v464
        %v471 = vmul.f32 %v470, 0.6931472
        %v472 = vlog2.pop %v465
        %v473 = vmul.f32 %v472, 0.6931472
        %v474 = vadd.f32 %v434, 1.0
        %v475 = vadd.f32 %v435, 1.0
        %v476 = vadd.f32 %v436, 1.0
        %v477 = vadd.f32 %v437, 1.0
        %v478 = vmul.f32 %v434, %v474
        %v479 = vmul.f32 %v435, %v475
        %v480 = vmul.f32 %v436, %v476
        %v481 = vmul.f32 %v437, %v477
        %v482 = vadd.f32 %v434, 2.0
        %v483 = vadd.f32 %v435, 2.0
        %v484 = vadd.f32 %v436, 2.0
        %v485 = vadd.f32 %v437, 2.0
        %v486 = vmul.f32 %v478, %v482
        %v487 = vmul.f32 %v479, %v483
        %v488 = vmul.f32 %v480, %v484
        %v489 = vmul.f32 %v481, %v485
        %v490 = vadd.f32 %v434, 3.0
        %v491 = vadd.f32 %v435, 3.0
        %v492 = vadd.f32 %v436, 3.0
        %v493 = vadd.f32 %v437, 3.0
        %v494 = vmul.f32 %v486, %v490
        %v495 = vmul.f32 %v487, %v491
        %v496 = vmul.f32 %v488, %v492
        %v497 = vmul.f32 %v489, %v493
        %v498 = vadd.f32 %v434, 4.0
        %v499 = vadd.f32 %v435, 4.0
        %v500 = vadd.f32 %v436, 4.0
        %v501 = vadd.f32 %v437, 4.0
        %v502 = vmul.f32 %v494, %v498
        %v503 = vmul.f32 %v495, %v499
        %v504 = vmul.f32 %v496, %v500
        %v505 = vmul.f32 %v497, %v501
        %v506 = vadd.f32 %v434, 5.0
        %v507 = vadd.f32 %v435, 5.0
        %v508 = vadd.f32 %v436, 5.0
        %v509 = vadd.f32 %v437, 5.0
        %v510 = vmul.f32 %v502, %v506
        %v511 = vmul.f32 %v503, %v507
        %v512 = vmul.f32 %v504, %v508
        %v513 = vmul.f32 %v505, %v509
        %v514 = vadd.f32 %v434, 6.0
        %v515 = vadd.f32 %v435, 6.0
        %v516 = vadd.f32 %v436, 6.0
        %v517 = vadd.f32 %v437, 6.0
        %v518 = vrcp.pop %v514
        %v519 = vrcp.pop %v515
        %v520 = vrcp.pop %v516
        %v521 = vrcp.pop %v517
        %v522 = vmul.f32 %v518, %v518
        %v523 = vmul.f32 %v519, %v519
        %v524 = vmul.f32 %v520, %v520
        %v525 = vmul.f32 %v521, %v521
        %v526 = vmul.f32 %v522, 0.0007936508
        %v527 = vmul.f32 %v523, 0.0007936508
        %v528 = vmul.f32 %v524, 0.0007936508
        %v529 = vmul.f32 %v525, 0.0007936508
        %v530 = vadd.f32 %v526, -0.0027777778
        %v531 = vadd.f32 %v527, -0.0027777778
        %v532 = vadd.f32 %v528, -0.0027777778
        %v533 = vadd.f32 %v529, -0.0027777778
        %v534 = vmul.f32 %v522, %v530
        %v535 = vmul.f32 %v523, %v531
        %v536 = vmul.f32 %v524, %v532
        %v537 = vmul.f32 %v525, %v533
        %v538 = vadd.f32 %v534, 0.083333336
        %v539 = vadd.f32 %v535, 0.083333336
        %v540 = vadd.f32 %v536, 0.083333336
        %v541 = vadd.f32 %v537, 0.083333336
        %v542 = vmul.f32 %v518, %v538
        %v543 = vmul.f32 %v519, %v539
        %v544 = vmul.f32 %v520, %v540
        %v545 = vmul.f32 %v521, %v541
        %v546 = vsub.f32 %v514, 0.5
        %v547 = vsub.f32 %v515, 0.5
        %v548 = vsub.f32 %v516, 0.5
        %v549 = vsub.f32 %v517, 0.5
        %v550 = vlog2.pop %v514
        %v551 = vmul.f32 %v550, 0.6931472
        %v552 = vlog2.pop %v515
        %v553 = vmul.f32 %v552, 0.6931472
        %v554 = vlog2.pop %v516
        %v555 = vmul.f32 %v554, 0.6931472
        %v556 = vlog2.pop %v517
        %v557 = vmul.f32 %v556, 0.6931472
        %v558 = vmul.f32 %v546, %v551
        %v559 = vmul.f32 %v547, %v553
        %v560 = vmul.f32 %v548, %v555
        %v561 = vmul.f32 %v549, %v557
        %v562 = vsub.f32 %v558, %v514
        %v563 = vsub.f32 %v559, %v515
        %v564 = vsub.f32 %v560, %v516
        %v565 = vsub.f32 %v561, %v517
        %v566 = vadd.f32 %v562, 0.9189385
        %v567 = vadd.f32 %v563, 0.9189385
        %v568 = vadd.f32 %v564, 0.9189385
        %v569 = vadd.f32 %v565, 0.9189385
        %v570 = vadd.f32 %v566, %v542
        %v571 = vadd.f32 %v567, %v543
        %v572 = vadd.f32 %v568, %v544
        %v573 = vadd.f32 %v569, %v545
        %v574 = vlog2.pop %v510
        %v575 = vmul.f32 %v574, 0.6931472
        %v576 = vlog2.pop %v511
        %v577 = vmul.f32 %v576, 0.6931472
        %v578 = vlog2.pop %v512
        %v579 = vmul.f32 %v578, 0.6931472
        %v580 = vlog2.pop %v513
        %v581 = vmul.f32 %v580, 0.6931472
        %v582 = vsub.f32 %v570, %v575
        %v583 = vsub.f32 %v571, %v577
        %v584 = vsub.f32 %v572, %v579
        %v585 = vsub.f32 %v573, %v581
        %v586 = vadd.f32 %v408, 1.0
        %v587 = vadd.f32 %v409, 1.0
        %v588 = vadd.f32 %v410, 1.0
        %v589 = vadd.f32 %v411, 1.0
        %v590 = vadd.f32 %v586, 1.0
        %v591 = vadd.f32 %v587, 1.0
        %v592 = vadd.f32 %v588, 1.0
        %v593 = vadd.f32 %v589, 1.0
        %v594 = vmul.f32 %v586, %v590
        %v595 = vmul.f32 %v587, %v591
        %v596 = vmul.f32 %v588, %v592
        %v597 = vmul.f32 %v589, %v593
        %v598 = vadd.f32 %v586, 2.0
        %v599 = vadd.f32 %v587, 2.0
        %v600 = vadd.f32 %v588, 2.0
        %v601 = vadd.f32 %v589, 2.0
        %v602 = vmul.f32 %v594, %v598
        %v603 = vmul.f32 %v595, %v599
        %v604 = vmul.f32 %v596, %v600
        %v605 = vmul.f32 %v597, %v601
        %v606 = vadd.f32 %v586, 3.0
        %v607 = vadd.f32 %v587, 3.0
        %v608 = vadd.f32 %v588, 3.0
        %v609 = vadd.f32 %v589, 3.0
        %v610 = vmul.f32 %v602, %v606
        %v611 = vmul.f32 %v603, %v607
        %v612 = vmul.f32 %v604, %v608
        %v613 = vmul.f32 %v605, %v609
        %v614 = vadd.f32 %v586, 4.0
        %v615 = vadd.f32 %v587, 4.0
        %v616 = vadd.f32 %v588, 4.0
        %v617 = vadd.f32 %v589, 4.0
        %v618 = vmul.f32 %v610, %v614
        %v619 = vmul.f32 %v611, %v615
        %v620 = vmul.f32 %v612, %v616
        %v621 = vmul.f32 %v613, %v617
        %v622 = vadd.f32 %v586, 5.0
        %v623 = vadd.f32 %v587, 5.0
        %v624 = vadd.f32 %v588, 5.0
        %v625 = vadd.f32 %v589, 5.0
        %v626 = vmul.f32 %v618, %v622
        %v627 = vmul.f32 %v619, %v623
        %v628 = vmul.f32 %v620, %v624
        %v629 = vmul.f32 %v621, %v625
        %v630 = vadd.f32 %v586, 6.0
        %v631 = vadd.f32 %v587, 6.0
        %v632 = vadd.f32 %v588, 6.0
        %v633 = vadd.f32 %v589, 6.0
        %v634 = vrcp.pop %v630
        %v635 = vrcp.pop %v631
        %v636 = vrcp.pop %v632
        %v637 = vrcp.pop %v633
        %v638 = vmul.f32 %v634, %v634
        %v639 = vmul.f32 %v635, %v635
        %v640 = vmul.f32 %v636, %v636
        %v641 = vmul.f32 %v637, %v637
        %v642 = vmul.f32 %v638, 0.0007936508
        %v643 = vmul.f32 %v639, 0.0007936508
        %v644 = vmul.f32 %v640, 0.0007936508
        %v645 = vmul.f32 %v641, 0.0007936508
        %v646 = vadd.f32 %v642, -0.0027777778
        %v647 = vadd.f32 %v643, -0.0027777778
        %v648 = vadd.f32 %v644, -0.0027777778
        %v649 = vadd.f32 %v645, -0.0027777778
        %v650 = vmul.f32 %v638, %v646
        %v651 = vmul.f32 %v639, %v647
        %v652 = vmul.f32 %v640, %v648
        %v653 = vmul.f32 %v641, %v649
        %v654 = vadd.f32 %v650, 0.083333336
        %v655 = vadd.f32 %v651, 0.083333336
        %v656 = vadd.f32 %v652, 0.083333336
        %v657 = vadd.f32 %v653, 0.083333336
        %v658 = vmul.f32 %v634, %v654
        %v659 = vmul.f32 %v635, %v655
        %v660 = vmul.f32 %v636, %v656
        %v661 = vmul.f32 %v637, %v657
        %v662 = vsub.f32 %v630, 0.5
        %v663 = vsub.f32 %v631, 0.5
        %v664 = vsub.f32 %v632, 0.5
        %v665 = vsub.f32 %v633, 0.5
        %v666 = vlog2.pop %v630
        %v667 = vmul.f32 %v666, 0.6931472
        %v668 = vlog2.pop %v631
        %v669 = vmul.f32 %v668, 0.6931472
        %v670 = vlog2.pop %v632
        %v671 = vmul.f32 %v670, 0.6931472
        %v672 = vlog2.pop %v633
        %v673 = vmul.f32 %v672, 0.6931472
        %v674 = vmul.f32 %v662, %v667
        %v675 = vmul.f32 %v663, %v669
        %v676 = vmul.f32 %v664, %v671
        %v677 = vmul.f32 %v665, %v673
        %v678 = vsub.f32 %v674, %v630
        %v679 = vsub.f32 %v675, %v631
        %v680 = vsub.f32 %v676, %v632
        %v681 = vsub.f32 %v677, %v633
        %v682 = vadd.f32 %v678, 0.9189385
        %v683 = vadd.f32 %v679, 0.9189385
        %v684 = vadd.f32 %v680, 0.9189385
        %v685 = vadd.f32 %v681, 0.9189385
        %v686 = vadd.f32 %v682, %v658
        %v687 = vadd.f32 %v683, %v659
        %v688 = vadd.f32 %v684, %v660
        %v689 = vadd.f32 %v685, %v661
        %v690 = vlog2.pop %v626
        %v691 = vmul.f32 %v690, 0.6931472
        %v692 = vlog2.pop %v627
        %v693 = vmul.f32 %v692, 0.6931472
        %v694 = vlog2.pop %v628
        %v695 = vmul.f32 %v694, 0.6931472
        %v696 = vlog2.pop %v629
        %v697 = vmul.f32 %v696, 0.6931472
        %v698 = vsub.f32 %v686, %v691
        %v699 = vsub.f32 %v687, %v693
        %v700 = vsub.f32 %v688, %v695
        %v701 = vsub.f32 %v689, %v697
        %v702 = vadd.f32 %v582, %v698
        %v703 = vadd.f32 %v583, %v699
        %v704 = vadd.f32 %v584, %v700
        %v705 = vadd.f32 %v585, %v701
        %v706 = vadd.f32 %v408, %v426
        %v707 = vadd.f32 %v409, %v427
        %v708 = vadd.f32 %v410, %v428
        %v709 = vadd.f32 %v411, %v429
        %v710 = vadd.f32 %v706, 1e-10
        %v711 = vadd.f32 %v707, 1e-10
        %v712 = vadd.f32 %v708, 1e-10
        %v713 = vadd.f32 %v709, 1e-10
        %v714 = vadd.f32 %v710, 1.0
        %v715 = vadd.f32 %v711, 1.0
        %v716 = vadd.f32 %v712, 1.0
        %v717 = vadd.f32 %v713, 1.0
        %v718 = vmul.f32 %v710, %v714
        %v719 = vmul.f32 %v711, %v715
        %v720 = vmul.f32 %v712, %v716
        %v721 = vmul.f32 %v713, %v717
        %v722 = vadd.f32 %v710, 2.0
        %v723 = vadd.f32 %v711, 2.0
        %v724 = vadd.f32 %v712, 2.0
        %v725 = vadd.f32 %v713, 2.0
        %v726 = vmul.f32 %v718, %v722
        %v727 = vmul.f32 %v719, %v723
        %v728 = vmul.f32 %v720, %v724
        %v729 = vmul.f32 %v721, %v725
        %v730 = vadd.f32 %v710, 3.0
        %v731 = vadd.f32 %v711, 3.0
        %v732 = vadd.f32 %v712, 3.0
        %v733 = vadd.f32 %v713, 3.0
        %v734 = vmul.f32 %v726, %v730
        %v735 = vmul.f32 %v727, %v731
        %v736 = vmul.f32 %v728, %v732
        %v737 = vmul.f32 %v729, %v733
        %v738 = vadd.f32 %v710, 4.0
        %v739 = vadd.f32 %v711, 4.0
        %v740 = vadd.f32 %v712, 4.0
        %v741 = vadd.f32 %v713, 4.0
        %v742 = vmul.f32 %v734, %v738
        %v743 = vmul.f32 %v735, %v739
        %v744 = vmul.f32 %v736, %v740
        %v745 = vmul.f32 %v737, %v741
        %v746 = vadd.f32 %v710, 5.0
        %v747 = vadd.f32 %v711, 5.0
        %v748 = vadd.f32 %v712, 5.0
        %v749 = vadd.f32 %v713, 5.0
        %v750 = vmul.f32 %v742, %v746
        %v751 = vmul.f32 %v743, %v747
        %v752 = vmul.f32 %v744, %v748
        %v753 = vmul.f32 %v745, %v749
        %v754 = vadd.f32 %v710, 6.0
        %v755 = vadd.f32 %v711, 6.0
        %v756 = vadd.f32 %v712, 6.0
        %v757 = vadd.f32 %v713, 6.0
        %v758 = vrcp.pop %v754
        %v759 = vrcp.pop %v755
        %v760 = vrcp.pop %v756
        %v761 = vrcp.pop %v757
        %v762 = vmul.f32 %v758, %v758
        %v763 = vmul.f32 %v759, %v759
        %v764 = vmul.f32 %v760, %v760
        %v765 = vmul.f32 %v761, %v761
        %v766 = vmul.f32 %v762, 0.0007936508
        %v767 = vmul.f32 %v763, 0.0007936508
        %v768 = vmul.f32 %v764, 0.0007936508
        %v769 = vmul.f32 %v765, 0.0007936508
        %v770 = vadd.f32 %v766, -0.0027777778
        %v771 = vadd.f32 %v767, -0.0027777778
        %v772 = vadd.f32 %v768, -0.0027777778
        %v773 = vadd.f32 %v769, -0.0027777778
        %v774 = vmul.f32 %v762, %v770
        %v775 = vmul.f32 %v763, %v771
        %v776 = vmul.f32 %v764, %v772
        %v777 = vmul.f32 %v765, %v773
        %v778 = vadd.f32 %v774, 0.083333336
        %v779 = vadd.f32 %v775, 0.083333336
        %v780 = vadd.f32 %v776, 0.083333336
        %v781 = vadd.f32 %v777, 0.083333336
        %v782 = vmul.f32 %v758, %v778
        %v783 = vmul.f32 %v759, %v779
        %v784 = vmul.f32 %v760, %v780
        %v785 = vmul.f32 %v761, %v781
        %v786 = vsub.f32 %v754, 0.5
        %v787 = vsub.f32 %v755, 0.5
        %v788 = vsub.f32 %v756, 0.5
        %v789 = vsub.f32 %v757, 0.5
        %v790 = vlog2.pop %v754
        %v791 = vmul.f32 %v790, 0.6931472
        %v792 = vlog2.pop %v755
        %v793 = vmul.f32 %v792, 0.6931472
        %v794 = vlog2.pop %v756
        %v795 = vmul.f32 %v794, 0.6931472
        %v796 = vlog2.pop %v757
        %v797 = vmul.f32 %v796, 0.6931472
        %v798 = vmul.f32 %v786, %v791
        %v799 = vmul.f32 %v787, %v793
        %v800 = vmul.f32 %v788, %v795
        %v801 = vmul.f32 %v789, %v797
        %v802 = vsub.f32 %v798, %v754
        %v803 = vsub.f32 %v799, %v755
        %v804 = vsub.f32 %v800, %v756
        %v805 = vsub.f32 %v801, %v757
        %v806 = vadd.f32 %v802, 0.9189385
        %v807 = vadd.f32 %v803, 0.9189385
        %v808 = vadd.f32 %v804, 0.9189385
        %v809 = vadd.f32 %v805, 0.9189385
        %v810 = vadd.f32 %v806, %v782
        %v811 = vadd.f32 %v807, %v783
        %v812 = vadd.f32 %v808, %v784
        %v813 = vadd.f32 %v809, %v785
        %v814 = vlog2.pop %v750
        %v815 = vmul.f32 %v814, 0.6931472
        %v816 = vlog2.pop %v751
        %v817 = vmul.f32 %v816, 0.6931472
        %v818 = vlog2.pop %v752
        %v819 = vmul.f32 %v818, 0.6931472
        %v820 = vlog2.pop %v753
        %v821 = vmul.f32 %v820, 0.6931472
        %v822 = vsub.f32 %v810, %v815
        %v823 = vsub.f32 %v811, %v817
        %v824 = vsub.f32 %v812, %v819
        %v825 = vsub.f32 %v813, %v821
        %v826 = vsub.f32 %v702, %v822
        %v827 = vsub.f32 %v703, %v823
        %v828 = vsub.f32 %v704, %v824
        %v829 = vsub.f32 %v705, %v825
        %v830 = vsub.f32 %v467, %v439
        %v831 = vsub.f32 %v469, %v441
        %v832 = vsub.f32 %v471, %v443
        %v833 = vsub.f32 %v473, %v445
        %v834 = vmul.f32 %v706, %v830
        %v835 = vmul.f32 %v707, %v831
        %v836 = vmul.f32 %v708, %v832
        %v837 = vmul.f32 %v709, %v833
        %v838 = vsub.f32 %v439, %v451
        %v839 = vsub.f32 %v441, %v453
        %v840 = vsub.f32 %v443, %v455
        %v841 = vsub.f32 %v445, %v457
        %v842 = vmul.f32 %v408, %v838
        %v843 = vmul.f32 %v409, %v839
        %v844 = vmul.f32 %v410, %v840
        %v845 = vmul.f32 %v411, %v841
        %v846 = vadd.f32 %v834, %v842
        %v847 = vadd.f32 %v835, %v843
        %v848 = vadd.f32 %v836, %v844
        %v849 = vadd.f32 %v837, %v845
        %v850 = vadd.f32 %v826, %v846
        %v851 = vadd.f32 %v827, %v847
        %v852 = vadd.f32 %v828, %v848
        %v853 = vadd.f32 %v829, %v849
        %v854 = vsub.f32 1.0, %v430
        %v855 = vsub.f32 1.0, %v431
        %v856 = vsub.f32 1.0, %v432
        %v857 = vsub.f32 1.0, %v433
        %v858 = vadd.f32 %v854, 1e-10
        %v859 = vadd.f32 %v855, 1e-10
        %v860 = vadd.f32 %v856, 1e-10
        %v861 = vadd.f32 %v857, 1e-10
        %v862 = vlog2.pop %v858
        %v863 = vmul.f32 %v862, 0.6931472
        %v864 = vlog2.pop %v859
        %v865 = vmul.f32 %v864, 0.6931472
        %v866 = vlog2.pop %v860
        %v867 = vmul.f32 %v866, 0.6931472
        %v868 = vlog2.pop %v861
        %v869 = vmul.f32 %v868, 0.6931472
        %v870 = vsub.f32 %v850, %v863
        %v871 = vsub.f32 %v851, %v865
        %v872 = vsub.f32 %v852, %v867
        %v873 = vsub.f32 %v853, %v869
        %v874 = vsub.f32 %v439, %v467
        %v875 = vsub.f32 %v441, %v469
        %v876 = vsub.f32 %v443, %v471
        %v877 = vsub.f32 %v445, %v473
        %v878 = vmul.f32 %v426, %v874
        %v879 = vmul.f32 %v427, %v875
        %v880 = vmul.f32 %v428, %v876
        %v881 = vmul.f32 %v429, %v877
        %v882 = vmul.f32 %v878, 1.442695
        %v883 = vpow.pop %v882
        %v884 = vmul.f32 %v879, 1.442695
        %v885 = vpow.pop %v884
        %v886 = vmul.f32 %v880, 1.442695
        %v887 = vpow.pop %v886
        %v888 = vmul.f32 %v881, 1.442695
        %v889 = vpow.pop %v888
        %v890 = vmul.f32 %v854, %v883
        %v891 = vmul.f32 %v855, %v885
        %v892 = vmul.f32 %v856, %v887
        %v893 = vmul.f32 %v857, %v889
        %v894 = vadd.f32 %v430, %v890
        %v895 = vadd.f32 %v431, %v891
        %v896 = vadd.f32 %v432, %v892
        %v897 = vadd.f32 %v433, %v893
        %v898 = vadd.f32 %v894, 1e-10
        %v899 = vadd.f32 %v895, 1e-10
        %v900 = vadd.f32 %v896, 1e-10
        %v901 = vadd.f32 %v897, 1e-10
        %v902 = vlog2.pop %v898
        %v903 = vmul.f32 %v902, 0.6931472
        %v904 = vlog2.pop %v899
        %v905 = vmul.f32 %v904, 0.6931472
        %v906 = vlog2.pop %v900
        %v907 = vmul.f32 %v906, 0.6931472
        %v908 = vlog2.pop %v901
        %v909 = vmul.f32 %v908, 0.6931472
        %v910 = vsub.f32 0.0, %v903
        %v911 = vsub.f32 0.0, %v905
        %v912 = vsub.f32 0.0, %v907
        %v913 = vsub.f32 0.0, %v909
        %vm914 = vcmp.le.f32.partialorder %v408, 1e-08
        %vm915 = vcmp.le.f32.partialorder %v409, 1e-08
        %vm916 = vcmp.le.f32.partialorder %v410, 1e-08
        %vm917 = vcmp.le.f32.partialorder %v411, 1e-08
        %v918 = vsel %vm914, %v910, %v870
        %v919 = vsel %vm915, %v911, %v871
        %v920 = vsel %vm916, %v912, %v872
        %v921 = vsel %vm917, %v913, %v873
        %v922 = vld [vmem:[#allocation2] sm:$0xff]
        %v923 = vld [vmem:[#allocation2 + $0x8] sm:$0xff]
        %v924 = vld [vmem:[#allocation2 + $0x10] sm:$0xff]
        %v925 = vld [vmem:[#allocation2 + $0x18] sm:$0xff]
        %v926 = vadd.f32 %v922, %v918
        %v927 = vadd.f32 %v923, %v919
        %v928 = vadd.f32 %v924, %v920
        %v929 = vadd.f32 %v925, %v921
        %930 = vst [vmem:[#allocation2] sm:$0xff] %v926
        %931 = vst [vmem:[#allocation2 + $0x8] sm:$0xff] %v927
        %932 = vst [vmem:[#allocation2 + $0x10] sm:$0xff] %v928
        %933 = vst [vmem:[#allocation2 + $0x18] sm:$0xff] %v929
        %p934 = scmp.eq.s32.totalorder %s33, 1
        // Predicated region
        $region61: #{tpu_custom_call.1} parent=39 // pred_check
          %p935 = pneg %p934
        $region62: #{tpu_custom_call.1} parent=39 // pred_check_branch
          %937 = sbr.rel (%p935) target = $region64
        $region63: #{tpu_custom_call.1} parent=39 // pred_region
          %v938 = vld [vmem:[#allocation2] sm:$0xff]
          %v939 = vld [vmem:[#allocation2 + $0x8] sm:$0xff]
          %v940 = vadd.f32 %v938, %v939
          %v941 = vld [vmem:[#allocation2 + $0x10] sm:$0xff]
          %v942 = vadd.f32 %v940, %v941
          %v943 = vld [vmem:[#allocation2 + $0x18] sm:$0xff]
          %v944 = vadd.f32 %v942, %v943
          %945 = vst [vmem:[%s387] sm:$0xff] %v944
        $region64: #{tpu_custom_call.1} parent=39 // pred_fallthru
          _
        %s946 = sand.u32 %s189, 1
        %s947 = scalar_lea.sflag [#allocation5], %s946
        %s948 = sand.u32 %s189, 1
        %s949 = smul.addr %s948, 8
        %s950 = scalar_lea.vmem [#allocation11], %s949
        // Predicated region
        $region65: #{tpu_custom_call.1} parent=39 // pred_check
          %p951 = pneg %p199
        $region66: #{tpu_custom_call.1} parent=39 // pred_check_branch
          %953 = sbr.rel (%p951) target = $region68
        $region67: #{tpu_custom_call.1} parent=39 // pred_region
          %s955 = ssub.s32 128, 128
          %956 = vsyncadd %s947, %s955
          %s957 = smul.addr %s32, 128
          %s958 = scalar_lea.hbm %s5, %s957
          %s960 = sshll.u32 %s950, 4
          %s961 = int_to_ptr.vmem [resolvable:$true] %s960
          %963 = dma.vmem_to_hbm [thread:$0]  %s961, 128, %s958, %s947
        $region68: #{tpu_custom_call.1} parent=39 // pred_fallthru
          _
      $region40: #{tpu_custom_call.1} parent=5 // pred_fallthru
        _
      %p964 = scmp.le.s32.totalorder 2, %s23
      // Predicated region
      $region69: #{tpu_custom_call.1} parent=5 // pred_check
        %p965 = pneg %p964
      $region70: #{tpu_custom_call.1} parent=5 // pred_check_branch
        %967 = sbr.rel (%p965) target = $region72
      $region71: #{tpu_custom_call.1} parent=5 // pred_region
        %s968 = ssub.s32 %s23, 2
        // Predicated region
        $region73: #{tpu_custom_call.1} parent=71 // pred_check
          %p969 = pneg %p205
        $region74: #{tpu_custom_call.1} parent=71 // pred_check_branch
          %971 = sbr.rel (%p969) target = $region76
        $region75: #{tpu_custom_call.1} parent=71 // pred_region
          %s972 = sand.u32 %s190, 1
          %s973 = scalar_lea.sflag [#allocation5], %s972
          %s974 = sand.u32 %s190, 1
          %s975 = smul.addr %s974, 8
          %s976 = scalar_lea.vmem [#allocation11], %s975
          %977 = dma.done %s973, 128
        $region76: #{tpu_custom_call.1} parent=71 // pred_fallthru
          _
      $region72: #{tpu_custom_call.1} parent=5 // pred_fallthru
        _
    $region6: #{tpu_custom_call.1} parent=1 // loop_footer
      %s27 = sadd.s32 1, %s23
    $region7: #{tpu_custom_call.1} parent=1 // loop_footer_branch
      %22 = sbr.rel target = $region3
    $region8: #{tpu_custom_call.1} parent=1 // loop_exit
      _
    %978 = vsyncpa [#allocation4], 1
    %s979 = scalar_lea.sflag [#allocation4], 1
    %980 = vsyncpa %s979, 1
    %981 = vsyncpa [#allocation7], 1
    %s982 = scalar_lea.sflag [#allocation7], 1
    %983 = vsyncpa %s982, 1
    %984 = vsyncpa [#allocation10], 1
    %s985 = scalar_lea.sflag [#allocation10], 1
    %986 = vsyncpa %s985, 1
    %987 = vsyncpa [#allocation5], 1
    %s988 = scalar_lea.sflag [#allocation5], 1
    %989 = vsyncpa %s988, 1

</llo_original>
